<compile_context>
chip_gen: v6e
topology: v6e:2x2x1
jax: 0.10.0
libtpu: 0.0.40
codegen_flags: <defaults>
</compile_context>

<pallas_src>
import math
import functools

import jax
import jax.numpy as jnp
from jax.experimental import pallas as pl
from jax.experimental.pallas import tpu as pltpu


# ----------------------------------------------------------------------------
# Parameter / buffer setup (glue, plain JAX) — matches the PyTorch buffer.
# ----------------------------------------------------------------------------
def make_positional_encoding(d_model: int, max_len: int = 500) -> jnp.ndarray:
    """Builds the (1, max_len, d_model) sinusoidal PE buffer, matching PyTorch."""
    position = jnp.arange(0, max_len, dtype=jnp.float32)[:, None]            # (L, 1)
    div_term = jnp.exp(
        jnp.arange(0, d_model, 2, dtype=jnp.float32)
        * (-math.log(10000.0) / d_model)
    )                                                                         # (D/2,)
    pe = jnp.zeros((max_len, d_model), dtype=jnp.float32)
    pe = pe.at[:, 0::2].set(jnp.sin(position * div_term))
    pe = pe.at[:, 1::2].set(jnp.cos(position * div_term))
    return pe[None, :, :]                                                     # (1, L, D)


def _dropout_threshold(p: float) -> int:
    """uint32 threshold t such that P(bits < t) == p for uniform uint32 bits."""
    t = int(round(float(p) * float(1 << 32)))
    return min(max(t, 0), (1 << 32) - 1)


# ----------------------------------------------------------------------------
# Kernels (lane-dense 2D layout: rows = batch, lanes = chunks of seq*d_model)
# ----------------------------------------------------------------------------
def _pe_add_kernel(x_ref, pe_ref, o_ref):
    """Eval-mode forward: out = x + pe (dropout is identity)."""
    # x_ref: (rt, lt); pe_ref: (1, lt) — broadcast over the row (batch) axis.
    o_ref[...] = (x_ref[...] + pe_ref[...]).astype(o_ref.dtype)


def _pe_add_dropout_kernel(x_ref, pe_ref, bits_ref, o_ref, *, threshold: int,
                           scale: float):
    """Train-mode forward: out = dropout(x + pe, p) with inverted scaling.

    Dropout = single uint32 compare (keep iff bits >= threshold) + select;
    scale = 1/(1-p) hoisted as a Python constant.
    """
    y = x_ref[...] + pe_ref[...]
    keep = bits_ref[...] >= jnp.uint32(threshold)
    o_ref[...] = jnp.where(keep, y * scale, 0.0).astype(o_ref.dtype)


# ----------------------------------------------------------------------------
# Tiling heuristics
# ----------------------------------------------------------------------------
# ~512K elements per block (~2 MiB f32 per stream).  With up to 4 streams
# (x, pe, bits, out) and 2 pipeline buffers that is well under the default
# scoped-VMEM limit on v5e (16 MiB), v6e (32 MiB) and v7x (32 MiB of 64 MiB
# physical), while giving >>0.35 µs of work per grid step.
_TARGET_BLOCK_ELEMS = 512 * 1024


def _pick_tiles(n_rows: int, n_lanes: int,
                target_elems: int = _TARGET_BLOCK_ELEMS):
    """Pick (row_tile, lane_tile) for a (n_rows, n_lanes) elementwise problem."""
    if n_lanes % 128 == 0:
        # Largest 128-multiple (power-of-two growth) dividing n_lanes, capped.
        lt = 128
        cap = min(n_lanes, target_elems)
        while lt * 2 <= cap and n_lanes % (lt * 2) == 0:
            lt *= 2
    else:
        # Odd lane dim: use the full (unaligned) lane extent — correct, just
        # falls back to masked stores for exotic shapes.
        lt = n_lanes

    max_rows = max(1, target_elems // lt)
    if n_rows <= max_rows:
        rt = n_rows
    else:
        # Largest sublane-aligned (multiple of 8) divisor of n_rows that fits.
        rt = 0
        cand = (max_rows // 8) * 8
        while cand >= 8:
            if n_rows % cand == 0:
                rt = cand
                break
            cand -= 8
        if rt == 0:
            rt = n_rows  # fallback: whole batch per block
    return rt, lt


# ----------------------------------------------------------------------------
# Wrapper
# ----------------------------------------------------------------------------
def positional_encoder_forward(
    x: jnp.ndarray,
    pe: jnp.ndarray,
    *,
    dropout_p: float = 0.1,
    training: bool = False,
    rng_key=None,
) -> jnp.ndarray:
    """x: (B, S, D); pe: (1, max_len, D).  Returns (B, S, D) in x.dtype."""
    B, S, D = x.shape
    F = S * D

    # Lane-dense 2D views: x -> (B, S*D), pe -> (1, S*D).  Free reshapes.
    x2 = x.reshape(B, F)
    pe2 = pe[:, :S, :].reshape(1, F).astype(x.dtype)

    rt, lt = _pick_tiles(B, F)
    # Lane tiles on the OUTER axis, row (batch) tiles on the INNER axis, so the
    # PE block index only changes on the slow axis and its tile is reused
    # across consecutive grid steps without a re-DMA.
    grid = (F // lt, B // rt)

    x_spec = pl.BlockSpec((rt, lt), lambda j, i: (i, j))
    pe_spec = pl.BlockSpec((1, lt), lambda j, i: (0, j))
    out_spec = pl.BlockSpec((rt, lt), lambda j, i: (i, j))
    out_shape = jax.ShapeDtypeStruct((B, F), x.dtype)

    compiler_params = pltpu.CompilerParams(
        dimension_semantics=("parallel", "parallel"),
        vmem_limit_bytes=32 * 1024 * 1024,
    )

    if not training or dropout_p == 0.0:
        out2 = pl.pallas_call(
            _pe_add_kernel,
            out_shape=out_shape,
            grid_spec=pltpu.PrefetchScalarGridSpec(
                num_scalar_prefetch=0,
                grid=grid,
                in_specs=[x_spec, pe_spec],
                out_specs=out_spec,
            ),
            compiler_params=compiler_params,
        )(x2, pe2)
        return out2.reshape(B, S, D)

    # Training mode: inverted dropout.  Random bits are generated on the host
    # side with jax.random so the kernel stays portable (and bit-exactly
    # checkable); semantics match nn.Dropout (not torch's RNG stream).
    # TODO(synk): on real TPU, pltpu.prng_random_bits would avoid streaming the
    # precomputed uint32 bits from HBM, but it has no CPU-interpret lowering.
    if rng_key is None:
        rng_key = jax.random.PRNGKey(0)
    bits = jax.random.bits(rng_key, (B, F), dtype=jnp.uint32)

    kernel = functools.partial(
        _pe_add_dropout_kernel,
        threshold=_dropout_threshold(dropout_p),
        scale=1.0 / (1.0 - float(dropout_p)),
    )
    out2 = pl.pallas_call(
        kernel,
        out_shape=out_shape,
        grid_spec=pltpu.PrefetchScalarGridSpec(
            num_scalar_prefetch=0,
            grid=grid,
            in_specs=[x_spec, pe_spec, x_spec],   # bits use the same tiling as x
            out_specs=out_spec,
        ),
        compiler_params=compiler_params,
    )(x2, pe2, bits)
    return out2.reshape(B, S, D)


# ----------------------------------------------------------------------------
# Pure-JAX reference (same math, same bit stream) for verification
# ----------------------------------------------------------------------------
def reference_forward(x, pe, *, dropout_p=0.1, training=False, rng_key=None):
    y = x + pe[:, : x.shape[1], :].astype(x.dtype)
    if not training or dropout_p == 0.0:
        return y
    B, S, D = x.shape
    bits = jax.random.bits(rng_key, (B, S * D), dtype=jnp.uint32).reshape(B, S, D)
    keep = bits >= jnp.uint32(_dropout_threshold(dropout_p))
    return jnp.where(keep, y * (1.0 / (1.0 - float(dropout_p))), 0.0).astype(x.dtype)


# ----------------------------------------------------------------------------
# Main
# ----------------------------------------------------------------------------
if __name__ == "__main__":
    batch, seq_len, d_model = 2, 8, 32
    max_len = 500
    dropout_p = 0.1

    key = jax.random.PRNGKey(0)
    x = jax.random.normal(key, (batch, seq_len, d_model), dtype=jnp.float32)
    pe = make_positional_encoding(d_model, max_len)

    # Eval-mode forward (dropout = identity): deterministic, checked vs reference.
    out_eval = positional_encoder_forward(x, pe, dropout_p=dropout_p, training=False)
    out_eval = jax.block_until_ready(out_eval)
    ref_eval = reference_forward(x, pe, dropout_p=dropout_p, training=False)
    assert out_eval.shape == (batch, seq_len, d_model)
    assert jnp.allclose(out_eval, ref_eval, atol=1e-6, rtol=1e-6), "eval-mode mismatch"

    # Train-mode forward: identical bit stream -> exact check against reference.
    drop_key = jax.random.PRNGKey(1234)
    out_train = positional_encoder_forward(
        x, pe, dropout_p=dropout_p, training=True, rng_key=drop_key
    )
    out_train = jax.block_until_ready(out_train)
    ref_train = reference_forward(
        x, pe, dropout_p=dropout_p, training=True, rng_key=drop_key
    )
    assert out_train.shape == (batch, seq_len, d_model)
    assert jnp.allclose(out_train, ref_train, atol=1e-5, rtol=1e-5), "train-mode mismatch"

    print("KERNEL_OK")
</pallas_src>

<mosaic_0001>
module attributes {stable_mosaic.version = 11 : i64} {
  func.func @_pe_add_kernel(%arg0: i32, %arg1: i32, %arg2: memref<2x256xf32, #tpu.memory_space<vmem>>, %arg3: memref<1x256xf32, #tpu.memory_space<vmem>>, %arg4: memref<2x256xf32, #tpu.memory_space<vmem>>) attributes {dimension_semantics = [#tpu.dimension_semantics<parallel>, #tpu.dimension_semantics<parallel>], iteration_bounds = array<i64: 1, 1>, scalar_prefetch = 0 : i64, scratch_operands = 0 : i64, tpu.core_type = #tpu.core_type<tc>, window_params = [{transform_indices = @transform_0, window_bounds = array<i64: 2, 256>}, {transform_indices = @transform_1, window_bounds = array<i64: 1, 256>}, {transform_indices = @transform_2, window_bounds = array<i64: 2, 256>}]} {
    %c0 = arith.constant 0 : index
    %c0_0 = arith.constant 0 : index
    %0 = vector.load %arg2[%c0, %c0_0] : memref<2x256xf32, #tpu.memory_space<vmem>>, vector<2x256xf32>
    %c0_1 = arith.constant 0 : index
    %c0_2 = arith.constant 0 : index
    %1 = vector.load %arg3[%c0_1, %c0_2] : memref<1x256xf32, #tpu.memory_space<vmem>>, vector<1x256xf32>
    %2 = vector.broadcast %1 : vector<1x256xf32> to vector<2x256xf32>
    %3 = arith.addf %0, %2 : vector<2x256xf32>
    %c0_3 = arith.constant 0 : index
    %c0_4 = arith.constant 0 : index
    %4 = vector.load %arg4[%c0_3, %c0_4] : memref<2x256xf32, #tpu.memory_space<vmem>>, vector<2x256xf32>
    tpu.vector_store %arg4[%c0_3, %c0_4], %3 {strides = array<i32>} : memref<2x256xf32, #tpu.memory_space<vmem>>, vector<2x256xf32>,
    return
  }
  func.func @transform_0(%arg0: i32, %arg1: i32) -> (i32, i32) {
    %c0_i32 = arith.constant 0 : i32
    return %arg1, %arg0 : i32, i32
  }
  func.func @transform_1(%arg0: i32, %arg1: i32) -> (i32, i32) {
    %c0_i32 = arith.constant 0 : i32
    %c0_i32_0 = arith.constant 0 : i32
    return %c0_i32, %arg0 : i32, i32
  }
  func.func @transform_2(%arg0: i32, %arg1: i32) -> (i32, i32) {
    %c0_i32 = arith.constant 0 : i32
    return %arg1, %arg0 : i32, i32
  }
}

</mosaic_0001>

<llo_original>
// kernel: tpu_custom_call.1
$region0: #{tpu_custom_call.1}
  #allocation0 [shape = 'u32[]', space=smem, size = 0x4, offset = 0x4, fixed_abs, tag = 'smem constant byte address 0x4 - core index']
  #allocation1 [shape = 'u32[144,128]{1,0:T(1,128)}', space=vmem, size = 0x12000, scoped, tag = 'internal scratch']
  %s0 = inlined_call_operand.hbm [shape: f32[2,256], index: 0, kind: input, shape index: {}]
  %s1 = inlined_call_operand.hbm [shape: f32[1,256], index: 1, kind: input, shape index: {}]
  %s2 = inlined_call_operand.hbm [shape: f32[2,256], index: 2, kind: output, shape index: {}]
  %s3 = sld [smem:[#allocation0]]
  $region26: #{tpu_custom_call.1} parent=0
    _
  %s5 = ssub.s32 1, %s3
  %s6 = scalar_select 0, %s5, %s3
  $region1: #{tpu_custom_call.1} parent=0
    #allocation2 [shape = 'u8[2048]{0}', space=vmem, size = 0x800, scoped, tag = 'input window, operand 0, single buffered']
    #allocation3 [shape = 's32[1]{0}', space=sflag, size = 0x4, scoped, tag = 'scoped memory for tpu_custom_call.1']
    #allocation4 [shape = 's32[1]{0}', space=sflag, size = 0x4, scoped, tag = 'scoped memory for tpu_custom_call.1']
    #allocation5 [shape = 'u8[1024]{0}', space=vmem, size = 0x400, scoped, tag = 'input window, operand 1, single buffered']
    #allocation6 [shape = 's32[1]{0}', space=sflag, size = 0x4, scoped, tag = 'scoped memory for tpu_custom_call.1']
    #allocation7 [shape = 'u8[2048]{0}', space=vmem, size = 0x800, scoped, tag = 'output window, operand 0, single buffered']
    %7 = vsyncpa [#allocation3], 0
    %8 = vsyncpa [#allocation6], 0
    %9 = vsyncpa [#allocation4], 0
    // Predicated region
    $region2: #{tpu_custom_call.1} parent=1 // pred_check
      _
    $region3: #{tpu_custom_call.1} parent=1 // pred_check_branch
      %11 = sbr.rel (0) target = $region5
    $region4: #{tpu_custom_call.1} parent=1 // pred_region
      %s13 = ssub.s32 64, 64
      %14 = vsyncadd [#allocation3], %s13
      %s16 = sshll.u32 [#allocation2], 4
      %s17 = int_to_ptr.vmem [resolvable:$true] %s16
      %19 = dma.hbm_to_vmem [thread:$0]  %s0, 64, %s17, [#allocation3]
    $region5: #{tpu_custom_call.1} parent=1 // pred_fallthru
      _
    // Predicated region
    $region6: #{tpu_custom_call.1} parent=1 // pred_check
      _
    $region7: #{tpu_custom_call.1} parent=1 // pred_check_branch
      %21 = sbr.rel (0) target = $region9
    $region8: #{tpu_custom_call.1} parent=1 // pred_region
      %s23 = ssub.s32 32, 32
      %24 = vsyncadd [#allocation6], %s23
      %s26 = sshll.u32 [#allocation5], 4
      %s27 = int_to_ptr.vmem [resolvable:$true] %s26
      %29 = dma.hbm_to_vmem [thread:$0]  %s1, 32, %s27, [#allocation6]
    $region9: #{tpu_custom_call.1} parent=1 // pred_fallthru
      _
    // Predicated region
    $region10: #{tpu_custom_call.1} parent=1 // pred_check
      _
    $region11: #{tpu_custom_call.1} parent=1 // pred_check_branch
      %31 = sbr.rel (0) target = $region13
    $region12: #{tpu_custom_call.1} parent=1 // pred_region
      %32 = dma.done [#allocation3], 64
    $region13: #{tpu_custom_call.1} parent=1 // pred_fallthru
      _
    // Predicated region
    $region14: #{tpu_custom_call.1} parent=1 // pred_check
      _
    $region15: #{tpu_custom_call.1} parent=1 // pred_check_branch
      %34 = sbr.rel (0) target = $region17
    $region16: #{tpu_custom_call.1} parent=1 // pred_region
      %35 = dma.done [#allocation6], 32
    $region17: #{tpu_custom_call.1} parent=1 // pred_fallthru
      _
    %v36 = vld [vmem:[#allocation2] sm:$0xf]
    %v37 = vld [vmem:[#allocation5] sm:$0x3]
    %v39 = vlaneseq
    %v40 = vshrl.u32 %v39, 7
    %v41 = vsub.s32 0, %v40
    %v42 = vrot.slane %v37, %v41
    %v43 = vlaneseq
    %v44 = vshrl.u32 %v43, 7
    %v45 = vsub.s32 1, %v44
    %v46 = vrot.slane %v37, %v45
    %v47 = vcombine.low %v42, %v46
    %v49 = vunpack.c.l.s4 1983009808
    %v50 = vunpack.c.0.s8 %v49
    %v51 = vlaneseq
    %v52 = vshrl.u32 %v51, 7
    %v53 = vsub.s32 %v50, %v52
    %v54 = vrot.slane %v47, %v53
    %v56 = vadd.f32 %v36, %v54
    %57 = vst [vmem:[#allocation7] sm:$0xf] %v56
    // Predicated region
    $region18: #{tpu_custom_call.1} parent=1 // pred_check
      _
    $region19: #{tpu_custom_call.1} parent=1 // pred_check_branch
      %59 = sbr.rel (0) target = $region21
    $region20: #{tpu_custom_call.1} parent=1 // pred_region
      %s61 = ssub.s32 64, 64
      %62 = vsyncadd [#allocation4], %s61
      %s64 = sshll.u32 [#allocation7], 4
      %s65 = int_to_ptr.vmem [resolvable:$true] %s64
      %67 = dma.vmem_to_hbm [thread:$0]  %s65, 64, %s2, [#allocation4]
    $region21: #{tpu_custom_call.1} parent=1 // pred_fallthru
      _
    // Predicated region
    $region22: #{tpu_custom_call.1} parent=1 // pred_check
      _
    $region23: #{tpu_custom_call.1} parent=1 // pred_check_branch
      %69 = sbr.rel (0) target = $region25
    $region24: #{tpu_custom_call.1} parent=1 // pred_region
      %70 = dma.done [#allocation4], 64
    $region25: #{tpu_custom_call.1} parent=1 // pred_fallthru
      _
    %71 = vsyncpa [#allocation3], 1
    %72 = vsyncpa [#allocation6], 1
    %73 = vsyncpa [#allocation4], 1

</llo_original>
